<compile_context>
chip_gen: v7x
topology: tpu7x:2x2x1
jax: 0.10.0
libtpu: 0.0.40
codegen_flags: <defaults>
</compile_context>

<pallas_src>
import functools

import jax
import jax.numpy as jnp
from jax.experimental import pallas as pl
from jax.experimental.pallas import tpu as pltpu

EPS = 1e-6                            # matches the PyTorch module (un-squared)
TARGET_BLOCK_BYTES = 4 * 1024 * 1024  # ~4 MiB per input block
MIN_SPLIT_BYTES = 1 * 1024 * 1024     # force >= 2 grid steps above this (v7x megacore)
VMEM_LIMIT_BYTES = 48 * 1024 * 1024   # explicit scoped-VMEM cap (>= v5e default, <= v7x physical)


def _round_down(v, mult):
    return (v // mult) * mult


def _round_up(v, mult):
    return -(-v // mult) * mult


def _choose_lanes(n):
    for w in (512, 256, 128):
        if n % w == 0:
            return w
    return None


def _choose_block_rows(m, lanes, itemsize):
    """Pick (block_rows, ragged) for an (m, lanes) view of the data."""
    # Native sublane tile: 8 rows for 32-bit, 16 for 16-bit, 32 for 8-bit.
    row_mult = max(8, 32 // itemsize)
    target = max(row_mult,
                 _round_down(TARGET_BLOCK_BYTES // (itemsize * lanes), row_mult))
    # v7x megacore: guarantee >= 2 near-equal blocks once the split pays off.
    if m * lanes * itemsize > MIN_SPLIT_BYTES:
        target = min(target, _round_up((m + 1) // 2, row_mult))
    if m <= target:
        # Single block; block dim == full array dim is always a legal tiling.
        return m, False
    # Prefer a divisor of m near the target: equal work per step, no mask.
    cand = _round_down(target, row_mult)
    floor = max(row_mult, target // 2)
    while cand >= floor:
        if m % cand == 0:
            return cand, False
        cand -= row_mult
    # Fall back: ragged last block, handled with a cheap row mask in-kernel.
    return _round_down(target, row_mult), True


def _charbonnier_block_kernel(x_ref, y_ref, out_ref, *,
                              valid_rows, block_rows, ragged):
    """One grid step: partial sum of sqrt((x-y)^2 + eps) over one block."""
    x = x_ref[...].astype(jnp.float32)
    y = y_ref[...].astype(jnp.float32)
    d = x - y
    err = jnp.sqrt(d * d + jnp.float32(EPS))
    if ragged:
        # Only the last block can hold out-of-bounds rows.  A (rows, 1) iota +
        # lane-broadcast select is cheap VALU filler under a DMA-bound kernel,
        # so we apply it unconditionally instead of branching on the step id.
        row0 = pl.program_id(0) * block_rows
        rows = jax.lax.broadcasted_iota(jnp.int32, (block_rows, 1), 0) + row0
        err = jnp.where(rows < valid_rows, err, jnp.float32(0.0))
    out_ref[0, 0] = jnp.sum(err)


def _charbonnier_partial_sum(x2d, y2d):
    """Pallas reduction: sum of sqrt((x-y)^2 + eps) over a 2-D (m, lanes) view."""
    m, lanes = x2d.shape
    itemsize = jnp.dtype(x2d.dtype).itemsize
    n_proc = m * lanes
    block_rows, ragged = _choose_block_rows(m, lanes, itemsize)
    num_blocks = pl.cdiv(m, block_rows)

    kernel = functools.partial(
        _charbonnier_block_kernel,
        valid_rows=m, block_rows=block_rows, ragged=ragged)

    partials = pl.pallas_call(
        kernel,
        out_shape=jax.ShapeDtypeStruct((num_blocks, 1), jnp.float32),
        grid=(num_blocks,),
        in_specs=[
            pl.BlockSpec((block_rows, lanes), lambda i: (i, 0)),
            pl.BlockSpec((block_rows, lanes), lambda i: (i, 0)),
        ],
        out_specs=pl.BlockSpec((1, 1), lambda i: (i, 0),
                               memory_space=pltpu.MemorySpace.SMEM),
        compiler_params=pltpu.CompilerParams(
            dimension_semantics=("parallel",),
            vmem_limit_bytes=VMEM_LIMIT_BYTES),
        cost_estimate=pl.CostEstimate(
            flops=3 * n_proc,
            transcendentals=n_proc,
            bytes_accessed=2 * n_proc * itemsize + num_blocks * 4),
    )(x2d, y2d)
    return jnp.sum(partials)


def l1_charbonnier_loss(x, y):
    assert x.shape == y.shape, (x.shape, y.shape)
    n = x.size

    x_flat = jnp.ravel(x)
    y_flat = jnp.ravel(y)

    lanes = _choose_lanes(n)
    if lanes is not None:
        total = _charbonnier_partial_sum(x_flat.reshape(n // lanes, lanes),
                                         y_flat.reshape(n // lanes, lanes))
    else:
        # n is not a multiple of 128: kernel handles the 128-aligned prefix,
        # the < 128-element tail is a tiny jnp reduction.  No jnp.pad re-write
        # of both full inputs.
        n_main = (n // 128) * 128
        dt = (x_flat[n_main:].astype(jnp.float32)
              - y_flat[n_main:].astype(jnp.float32))
        total = jnp.sum(jnp.sqrt(dt * dt + jnp.float32(EPS)))
        if n_main:
            total = total + _charbonnier_partial_sum(
                x_flat[:n_main].reshape(n_main // 128, 128),
                y_flat[:n_main].reshape(n_main // 128, 128))
    return total / jnp.float32(n)


def l1_charbonnier_loss_ref(x, y):
    d = x.astype(jnp.float32) - y.astype(jnp.float32)
    return jnp.mean(jnp.sqrt(d * d + jnp.float32(EPS)))


if __name__ == "__main__":
    loss_fn = jax.jit(l1_charbonnier_loss)
    ref_fn = jax.jit(l1_charbonnier_loss_ref)
    base_key = jax.random.PRNGKey(0)

    def check(shape, salt, dtype=jnp.float32, rtol=1e-5, atol=1e-6):
        kx, ky = jax.random.split(jax.random.fold_in(base_key, salt))
        x = jax.random.normal(kx, shape, dtype=jnp.float32).astype(dtype)
        y = jax.random.normal(ky, shape, dtype=jnp.float32).astype(dtype)
        got = jax.block_until_ready(loss_fn(x, y))
        want = jax.block_until_ready(ref_fn(x, y))
        assert jnp.allclose(got, want, rtol=rtol, atol=atol), (shape, dtype, got, want)

    # Primary case: small NCHW pair, as the PyTorch module expects.
    check((2, 4, 16, 16), salt=0)
    # Two balanced blocks (megacore split) with a divisor block_rows -> no mask.
    check((8, 8, 100, 128), salt=1, rtol=1e-4)
    # Row-ragged multi-block case (no divisor near target -> masked last block).
    check((1, 2, 2049, 128), salt=2, rtol=1e-4)
    # n not a multiple of 128: aligned prefix (kernel) + tiny tail (jnp).
    check((2, 3, 5, 17), salt=3)
    # Tiny input smaller than one 128-lane row (pure tail path).
    check((1, 3, 7, 5), salt=4)
    # bf16 inputs: exercises itemsize-aware block sizing and in-kernel upcast.
    check((2, 4, 16, 16), salt=5, dtype=jnp.bfloat16)

    print("KERNEL_OK")
</pallas_src>

<mosaic_0001>
module attributes {stable_mosaic.version = 11 : i64} {
  func.func @_charbonnier_block_kernel(%arg0: i32, %arg1: memref<4x512xf32, #tpu.memory_space<vmem>>, %arg2: memref<4x512xf32, #tpu.memory_space<vmem>>, %arg3: memref<1x1xf32, #tpu.memory_space<smem>>) attributes {dimension_semantics = [#tpu.dimension_semantics<parallel>], iteration_bounds = array<i64: 1>, scalar_prefetch = 0 : i64, scratch_operands = 0 : i64, tpu.core_type = #tpu.core_type<tc>, window_params = [{transform_indices = @transform_0, window_bounds = array<i64: 4, 512>}, {transform_indices = @transform_1, window_bounds = array<i64: 4, 512>}, {transform_indices = @transform_2, window_bounds = array<i64: 1, 1>}]} {
    %c0 = arith.constant 0 : index
    %c0_0 = arith.constant 0 : index
    %0 = vector.load %arg1[%c0, %c0_0] : memref<4x512xf32, #tpu.memory_space<vmem>>, vector<4x512xf32>
    %c0_1 = arith.constant 0 : index
    %c0_2 = arith.constant 0 : index
    %1 = vector.load %arg2[%c0_1, %c0_2] : memref<4x512xf32, #tpu.memory_space<vmem>>, vector<4x512xf32>
    %2 = arith.subf %0, %1 : vector<4x512xf32>
    %3 = arith.mulf %2, %2 : vector<4x512xf32>
    %cst = arith.constant 9.99999997E-7 : f32
    %4 = vector.broadcast %cst : f32 to vector<4x512xf32>
    %5 = arith.addf %3, %4 : vector<4x512xf32>
    %6 = math.sqrt %5 : vector<4x512xf32>
    %7 = vector.shape_cast %6 : vector<4x512xf32> to vector<1x4x512xf32>
    %cst_3 = arith.constant dense<0.000000e+00> : vector<1xf32>
    %8 = vector.multi_reduction <add>, %7, %cst_3 [1, 2] : vector<1x4x512xf32> to vector<1xf32>
    %9 = vector.shape_cast %8 : vector<1xf32> to vector<1x1x1xf32>
    %10 = vector.extract %9[0, 0, 0] : f32 from vector<1x1x1xf32>
    %c0_4 = arith.constant 0 : index
    %c0_5 = arith.constant 0 : index
    %11 = memref.load %arg3[%c0_4, %c0_5] : memref<1x1xf32, #tpu.memory_space<smem>>
    memref.store %10, %arg3[%c0_4, %c0_5] : memref<1x1xf32, #tpu.memory_space<smem>>
    return
  }
  func.func @transform_0(%arg0: i32) -> (i32, i32) {
    %c0_i32 = arith.constant 0 : i32
    %c0_i32_0 = arith.constant 0 : i32
    return %arg0, %c0_i32 : i32, i32
  }
  func.func @transform_1(%arg0: i32) -> (i32, i32) {
    %c0_i32 = arith.constant 0 : i32
    %c0_i32_0 = arith.constant 0 : i32
    return %arg0, %c0_i32 : i32, i32
  }
  func.func @transform_2(%arg0: i32) -> (i32, i32) {
    %c0_i32 = arith.constant 0 : i32
    %c0_i32_0 = arith.constant 0 : i32
    return %arg0, %c0_i32 : i32, i32
  }
}

</mosaic_0001>

<llo_original>
// kernel: l1_charbonnier_loss.1
$region0: #{l1_charbonnier_loss.1}
  #allocation0 [shape = 'u32[]', space=smem, size = 0x4, offset = 0x4, fixed_abs, tag = 'smem constant byte address 0x4 - core index']
  #allocation1 [shape = 'u32[144,128]{1,0:T(1,128)}', space=vmem, size = 0x12000, scoped, tag = 'internal scratch']
  %s0 = inlined_call_operand.vmem [shape: f32[4,512], index: 0, kind: input, shape index: {}]
  %s1 = inlined_call_operand.vmem [shape: f32[4,512], index: 1, kind: input, shape index: {}]
  %s2 = inlined_call_operand.hbm [shape: f32[1,1], index: 2, kind: output, shape index: {}]
  %s3 = sld [smem:[#allocation0]]
  $region18: #{l1_charbonnier_loss.1} parent=0
    _
  %s5 = ssub.s32 1, %s3
  %s6 = scalar_select 0, %s5, %s3
  $region1: #{l1_charbonnier_loss.1} parent=0
    #allocation2 [shape = 'u8[512]{0}', space=smem, size = 0x200, scoped, tag = 'output window, operand 0, single buffered']
    #allocation3 [shape = 's32[1]{0}', space=sflag, size = 0x4, scoped, tag = 'scoped memory for l1_charbonnier_loss.1']
    %7 = vsyncpa [#allocation3], 0
    // Predicated region
    $region2: #{l1_charbonnier_loss.1} parent=1 // pred_check
      _
    $region3: #{l1_charbonnier_loss.1} parent=1 // pred_check_branch
      %9 = sbr.rel (0) target = $region5
    $region4: #{l1_charbonnier_loss.1} parent=1 // pred_region
      _
    $region5: #{l1_charbonnier_loss.1} parent=1 // pred_fallthru
      _
    // Predicated region
    $region6: #{l1_charbonnier_loss.1} parent=1 // pred_check
      _
    $region7: #{l1_charbonnier_loss.1} parent=1 // pred_check_branch
      %11 = sbr.rel (0) target = $region9
    $region8: #{l1_charbonnier_loss.1} parent=1 // pred_region
      _
    $region9: #{l1_charbonnier_loss.1} parent=1 // pred_fallthru
      _
    %v12 = vld [vmem:[%s0] sm:$0xff]
    %v13 = vld [vmem:[%s0 + $0x8] sm:$0xff]
    %v14 = vld [vmem:[%s1] sm:$0xff]
    %v15 = vld [vmem:[%s1 + $0x8] sm:$0xff]
    %v16 = vsub.f32 %v12, %v14
    %v17 = vsub.f32 %v13, %v15
    %v18 = vmul.f32 %v16, %v16
    %v19 = vmul.f32 %v17, %v17
    %v20 = vadd.f32 %v18, 1e-06
    %v21 = vadd.f32 %v19, 1e-06
    %v22 = vrsqrt.pop %v20
    %v23 = vmul.f32 %v20, %v22
    %vm24 = vcmp.eq.f32.partialorder %v20, inf
    %v25 = vsel %vm24, %v20, %v23
    %vm26 = vcmp.eq.f32.partialorder %v20, 0.0
    %v27 = vand.u32 %v20, 2147483648
    %v28 = vsel %vm26, %v27, %v25
    %v29 = vrsqrt.pop %v21
    %v30 = vmul.f32 %v21, %v29
    %vm31 = vcmp.eq.f32.partialorder %v21, inf
    %v32 = vsel %vm31, %v21, %v30
    %vm33 = vcmp.eq.f32.partialorder %v21, 0.0
    %v34 = vand.u32 %v21, 2147483648
    %v35 = vsel %vm33, %v34, %v32
    %v38 = vcombine.high %v28, %v28
    %v39 = vcombine.high %v35, %v35
    %vm42 = vcmask 1043456
    %v43 = vsel %vm42, %v28, 0.0
    %v44 = vsel %vm42, %v38, 0.0
    %v45 = vadd.f32 %v43, %v44
    %v46 = vsel %vm42, %v35, 0.0
    %v47 = vadd.f32 %v45, %v46
    %v48 = vsel %vm42, %v39, 0.0
    %v49 = vadd.f32 %v47, %v48
    %50 = vadd.xlane.f32.xlu0 %v49
    %v51 = vpop.xlane.xlu0 %50
    %v52 = vrot.slane %v51, 4
    %v53 = vadd.f32 %v51, %v52
    %v54 = vrot.slane %v53, 2
    %v55 = vadd.f32 %v53, %v54
    %v56 = vrot.slane %v55, 1
    %v57 = vadd.f32 %v55, %v56
    %s58 = vtos %v57
    %s59 = scalar_lea.smem [#allocation2], 0
    %60 = sst [smem:[%s59]] %s58
    // Predicated region
    $region10: #{l1_charbonnier_loss.1} parent=1 // pred_check
      _
    $region11: #{l1_charbonnier_loss.1} parent=1 // pred_check_branch
      %62 = sbr.rel (0) target = $region13
    $region12: #{l1_charbonnier_loss.1} parent=1 // pred_region
      %s64 = ssub.s32 16, 16
      %65 = vsyncadd [#allocation3], %s64
      %68 = dma.smem_to_hbm [#allocation2], 16, %s2, [#allocation3]
    $region13: #{l1_charbonnier_loss.1} parent=1 // pred_fallthru
      _
    // Predicated region
    $region14: #{l1_charbonnier_loss.1} parent=1 // pred_check
      _
    $region15: #{l1_charbonnier_loss.1} parent=1 // pred_check_branch
      %70 = sbr.rel (0) target = $region17
    $region16: #{l1_charbonnier_loss.1} parent=1 // pred_region
      %71 = dma.done [#allocation3], 16
    $region17: #{l1_charbonnier_loss.1} parent=1 // pred_fallthru
      _
    %72 = sfence
    %73 = vsyncpa [#allocation3], 1

</llo_original>
